<compile_context>
chip_gen: v7x
topology: tpu7x:2x2x1
jax: 0.10.0
libtpu: 0.0.40
codegen_flags: <defaults>
</compile_context>

<pallas_src>
import functools

import jax
import jax.numpy as jnp
from jax.experimental import pallas as pl
from jax.experimental.pallas import tpu as pltpu


def _leaky_relu_inverse_kernel(x_ref, o_ref, *, inv_negative_slope):
    x = x_ref[...]
    o_ref[...] = jnp.where(x >= 0, x, x * inv_negative_slope).astype(o_ref.dtype)


def _sublane_align(dtype):
    itemsize = jnp.dtype(dtype).itemsize
    if itemsize >= 4:
        return 8
    if itemsize == 2:
        return 16
    return 32


_LANE_CHOICES = (4096, 2048, 1024, 512, 256, 128)
# ~2 MiB input tile -> 4 double-buffered buffers (in + out) ~= 8 MiB VMEM.
_TARGET_TILE_BYTES = 2 * 1024 * 1024


def _run_2d(x2d, inv_negative_slope):
    rows, lanes = x2d.shape
    dtype = x2d.dtype
    itemsize = jnp.dtype(dtype).itemsize
    align = _sublane_align(dtype)

    # Big, lane-dense tile rounded down to the sublane alignment.
    target_rows = max(align, (_TARGET_TILE_BYTES // (lanes * itemsize)) // align * align)

    if rows <= target_rows:
        # Whole array in a single block (block shape == array shape is always legal).
        block_rows = rows
        grid = (1,)
    else:
        block_rows = max(align, (min(rows, target_rows) // align) * align)
        # Pallas clips the ragged trailing block: out-of-bounds stores are
        # dropped, which is safe for a pure elementwise op.
        grid = (pl.cdiv(rows, block_rows),)

    kernel = functools.partial(
        _leaky_relu_inverse_kernel, inv_negative_slope=inv_negative_slope
    )

    return pl.pallas_call(
        kernel,
        out_shape=jax.ShapeDtypeStruct((rows, lanes), dtype),
        grid_spec=pltpu.PrefetchScalarGridSpec(
            num_scalar_prefetch=0,
            grid=grid,
            in_specs=[pl.BlockSpec((block_rows, lanes), lambda i: (i, 0))],
            out_specs=pl.BlockSpec((block_rows, lanes), lambda i: (i, 0)),
        ),
        compiler_params=pltpu.CompilerParams(
            dimension_semantics=("parallel",),
        ),
    )(x2d)


def leaky_relu_inverse(x, negative_slope=0.01):
    """Inverse LeakyReLU: identity for x >= 0, x * (1/negative_slope) for x < 0."""
    inv_negative_slope = 1.0 / negative_slope  # same precomputed reciprocal as the module

    orig_shape = x.shape
    n = x.size
    if n == 0:
        return x

    # Fast path: widest lane dim that divides n exactly -> no pad / slice traffic.
    lanes = next((l for l in _LANE_CHOICES if n % l == 0), None)
    if lanes is not None:
        out2d = _run_2d(x.reshape(n // lanes, lanes), inv_negative_slope)
        return out2d.reshape(orig_shape)

    # Ragged fallback: pad flat view up to a multiple of 512 lanes.
    lanes = 512
    rows = pl.cdiv(n, lanes)
    padded_n = rows * lanes
    x_flat = jnp.pad(jnp.ravel(x), (0, padded_n - n))
    out2d = _run_2d(x_flat.reshape(rows, lanes), inv_negative_slope)
    return out2d.reshape(-1)[:n].reshape(orig_shape)


if __name__ == "__main__":
    key = jax.random.PRNGKey(0)
    negative_slope = 0.01
    inv = 1.0 / negative_slope

    # Primary case: typical NCHW activation (fast path, single block).
    x = jax.random.normal(key, (2, 4, 16, 16), dtype=jnp.float32)
    out = jax.block_until_ready(leaky_relu_inverse(x, negative_slope))
    ref = jnp.where(x >= 0, x, x * inv)
    assert out.shape == x.shape and out.dtype == x.dtype
    assert jnp.allclose(out, ref, atol=1e-6, rtol=1e-6)

    # Larger case exercising the tiled (multi-block) fast path.
    x2 = jax.random.normal(jax.random.PRNGKey(1), (8, 32, 64, 64), dtype=jnp.float32)
    out2 = jax.block_until_ready(leaky_relu_inverse(x2, negative_slope))
    ref2 = jnp.where(x2 >= 0, x2, x2 * inv)
    assert jnp.allclose(out2, ref2, atol=1e-6, rtol=1e-6)

    # Ragged case exercising the padded fallback path.
    x3 = jax.random.normal(jax.random.PRNGKey(2), (2, 4, 17, 5), dtype=jnp.float32)
    out3 = jax.block_until_ready(leaky_relu_inverse(x3, negative_slope))
    ref3 = jnp.where(x3 >= 0, x3, x3 * inv)
    assert out3.shape == x3.shape
    assert jnp.allclose(out3, ref3, atol=1e-6, rtol=1e-6)

    print("KERNEL_OK")
</pallas_src>

<mosaic_0001>
module attributes {stable_mosaic.version = 11 : i64} {
  func.func @_leaky_relu_inverse_kernel(%arg0: i32, %arg1: memref<1x2048xf32, #tpu.memory_space<vmem>>, %arg2: memref<1x2048xf32, #tpu.memory_space<vmem>>) attributes {dimension_semantics = [#tpu.dimension_semantics<parallel>], iteration_bounds = array<i64: 1>, scalar_prefetch = 0 : i64, scratch_operands = 0 : i64, tpu.core_type = #tpu.core_type<tc>, window_params = [{transform_indices = @transform_0, window_bounds = array<i64: 1, 2048>}, {transform_indices = @transform_1, window_bounds = array<i64: 1, 2048>}]} {
    %c0 = arith.constant 0 : index
    %c0_0 = arith.constant 0 : index
    %0 = vector.load %arg1[%c0, %c0_0] : memref<1x2048xf32, #tpu.memory_space<vmem>>, vector<1x2048xf32>
    %cst = arith.constant 0.000000e+00 : f32
    %1 = vector.broadcast %cst : f32 to vector<1x2048xf32>
    %2 = arith.cmpf oge, %0, %1 : vector<1x2048xf32>
    %cst_1 = arith.constant 1.000000e+02 : f32
    %3 = vector.broadcast %cst_1 : f32 to vector<1x2048xf32>
    %4 = arith.mulf %0, %3 : vector<1x2048xf32>
    %5 = arith.select %2, %0, %4 : vector<1x2048xi1>, vector<1x2048xf32>
    %c0_2 = arith.constant 0 : index
    %c0_3 = arith.constant 0 : index
    %6 = vector.load %arg2[%c0_2, %c0_3] : memref<1x2048xf32, #tpu.memory_space<vmem>>, vector<1x2048xf32>
    tpu.vector_store %arg2[%c0_2, %c0_3], %5 {strides = array<i32>} : memref<1x2048xf32, #tpu.memory_space<vmem>>, vector<1x2048xf32>,
    return
  }
  func.func @transform_0(%arg0: i32) -> (i32, i32) {
    %c0_i32 = arith.constant 0 : i32
    %c0_i32_0 = arith.constant 0 : i32
    return %arg0, %c0_i32 : i32, i32
  }
  func.func @transform_1(%arg0: i32) -> (i32, i32) {
    %c0_i32 = arith.constant 0 : i32
    %c0_i32_0 = arith.constant 0 : i32
    return %arg0, %c0_i32 : i32, i32
  }
}

</mosaic_0001>

<llo_original>
// kernel: tpu_custom_call.1
$region0: #{tpu_custom_call.1}
  #allocation0 [shape = 'u32[]', space=smem, size = 0x4, offset = 0x4, fixed_abs, tag = 'smem constant byte address 0x4 - core index']
  #allocation1 [shape = 'u32[144,128]{1,0:T(1,128)}', space=vmem, size = 0x12000, scoped, tag = 'internal scratch']
  %s0 = inlined_call_operand.hbm [shape: f32[1,2048], index: 0, kind: input, shape index: {}]
  %s1 = inlined_call_operand.hbm [shape: f32[1,2048], index: 1, kind: output, shape index: {}]
  %s2 = sld [smem:[#allocation0]]
  $region18: #{tpu_custom_call.1} parent=0
    _
  %s4 = ssub.s32 1, %s2
  %s5 = scalar_select 0, %s4, %s2
  $region1: #{tpu_custom_call.1} parent=0
    #allocation2 [shape = 'u8[8192]{0}', space=vmem, size = 0x2000, scoped, tag = 'input window, operand 0, single buffered']
    #allocation3 [shape = 's32[1]{0}', space=sflag, size = 0x4, scoped, tag = 'scoped memory for tpu_custom_call.1']
    #allocation4 [shape = 's32[1]{0}', space=sflag, size = 0x4, scoped, tag = 'scoped memory for tpu_custom_call.1']
    #allocation5 [shape = 'u8[8192]{0}', space=vmem, size = 0x2000, scoped, tag = 'output window, operand 0, single buffered']
    %6 = vsyncpa [#allocation3], 0
    %7 = vsyncpa [#allocation4], 0
    // Predicated region
    $region2: #{tpu_custom_call.1} parent=1 // pred_check
      _
    $region3: #{tpu_custom_call.1} parent=1 // pred_check_branch
      %9 = sbr.rel (0) target = $region5
    $region4: #{tpu_custom_call.1} parent=1 // pred_region
      %s11 = ssub.s32 256, 256
      %12 = vsyncadd [#allocation3], %s11
      %s14 = sshll.u32 [#allocation2], 4
      %s15 = int_to_ptr.vmem [resolvable:$true] %s14
      %17 = dma.hbm_to_vmem [thread:$0]  %s0, 256, %s15, [#allocation3]
    $region5: #{tpu_custom_call.1} parent=1 // pred_fallthru
      _
    // Predicated region
    $region6: #{tpu_custom_call.1} parent=1 // pred_check
      _
    $region7: #{tpu_custom_call.1} parent=1 // pred_check_branch
      %19 = sbr.rel (0) target = $region9
    $region8: #{tpu_custom_call.1} parent=1 // pred_region
      %20 = dma.done [#allocation3], 256
    $region9: #{tpu_custom_call.1} parent=1 // pred_fallthru
      _
    %v21 = vld [vmem:[#allocation2] sm:$0xff]
    %v22 = vld [vmem:[#allocation2 + $0x8] sm:$0xff]
    %vm23 = vcmp.ge.f32.partialorder %v21, 0.0
    %vm24 = vcmp.ge.f32.partialorder %v22, 0.0
    %v25 = vmul.f32 %v21, 100.0
    %v26 = vmul.f32 %v22, 100.0
    %v27 = vsel %vm23, %v21, %v25
    %v28 = vsel %vm24, %v22, %v26
    %29 = vst [vmem:[#allocation5] sm:$0xff] %v27
    %30 = vst [vmem:[#allocation5 + $0x8] sm:$0xff] %v28
    // Predicated region
    $region10: #{tpu_custom_call.1} parent=1 // pred_check
      _
    $region11: #{tpu_custom_call.1} parent=1 // pred_check_branch
      %32 = sbr.rel (0) target = $region13
    $region12: #{tpu_custom_call.1} parent=1 // pred_region
      %s34 = ssub.s32 256, 256
      %35 = vsyncadd [#allocation4], %s34
      %s37 = sshll.u32 [#allocation5], 4
      %s38 = int_to_ptr.vmem [resolvable:$true] %s37
      %40 = dma.vmem_to_hbm [thread:$0]  %s38, 256, %s1, [#allocation4]
    $region13: #{tpu_custom_call.1} parent=1 // pred_fallthru
      _
    // Predicated region
    $region14: #{tpu_custom_call.1} parent=1 // pred_check
      _
    $region15: #{tpu_custom_call.1} parent=1 // pred_check_branch
      %42 = sbr.rel (0) target = $region17
    $region16: #{tpu_custom_call.1} parent=1 // pred_region
      %43 = dma.done [#allocation4], 256
    $region17: #{tpu_custom_call.1} parent=1 // pred_fallthru
      _
    %44 = vsyncpa [#allocation3], 1
    %45 = vsyncpa [#allocation4], 1

</llo_original>
